<compile_context>
chip_gen: v7x
topology: tpu7x:2x2x1
jax: 0.10.0
libtpu: 0.0.40
codegen_flags: <defaults>
</compile_context>

<pallas_src>
import jax
import jax.numpy as jnp
from jax.experimental import pallas as pl
from jax.experimental.pallas import tpu as pltpu


# ----------------------------------------------------------------------------
# 1) The real forward pass: zero-copy identity (no HBM traffic, no launch).
# ----------------------------------------------------------------------------
def identity(x: jax.Array) -> jax.Array:
    """nn.Identity.forward: y = x."""
    return x


# ----------------------------------------------------------------------------
# 2) Pallas-exercised path: direct HBM->HBM DMA copy (no VMEM round trip).
# ----------------------------------------------------------------------------
_MAX_DMA_CHUNKS = 4
_MIN_CHUNK_BYTES = 8 << 20  # don't bother splitting copies smaller than ~8 MiB


def _make_hbm_copy_kernel(chunks):
    """Kernel copying src->dst HBM refs via `len(chunks)` concurrent DMAs.

    `chunks` is a tuple of static (start, size) pairs along the leading axis.
    """
    n_chunks = len(chunks)

    def kernel(x_hbm, o_hbm, sems):
        if n_chunks == 1:
            cp = pltpu.make_async_copy(x_hbm, o_hbm, sems.at[0])
            cp.start()
            cp.wait()
            return
        started = []
        for idx, (start, size) in enumerate(chunks):
            cp = pltpu.make_async_copy(
                x_hbm.at[pl.ds(start, size)],
                o_hbm.at[pl.ds(start, size)],
                sems.at[idx],
            )
            cp.start()
            started.append(cp)
        for cp in started:
            cp.wait()

    return kernel


def identity_pallas(x: jax.Array) -> jax.Array:
    """Identity as a Pallas kernel: HBM->HBM DMA, no VMEM/vreg traffic."""
    if x.ndim == 0 or x.size == 0:
        return x  # nothing worth a DMA

    itemsize = jnp.dtype(x.dtype).itemsize
    nbytes = x.size * itemsize

    # Static chunking over the leading axis (a few DMAs in flight for big copies).
    lead = x.shape[0]
    n_chunks = 1
    if nbytes >= 2 * _MIN_CHUNK_BYTES and lead >= 2:
        n_chunks = int(min(_MAX_DMA_CHUNKS, lead, max(2, nbytes // _MIN_CHUNK_BYTES)))
    base, rem = divmod(lead, n_chunks)
    chunks, start = [], 0
    for c in range(n_chunks):
        size = base + (1 if c < rem else 0)
        chunks.append((start, size))
        start += size
    chunks = tuple(chunks)

    cost = pl.CostEstimate(flops=0, transcendentals=0, bytes_accessed=2 * nbytes)
    return pl.pallas_call(
        _make_hbm_copy_kernel(chunks),
        out_shape=jax.ShapeDtypeStruct(x.shape, x.dtype),
        in_specs=[pl.BlockSpec(memory_space=pl.ANY)],
        out_specs=pl.BlockSpec(memory_space=pl.ANY),
        scratch_shapes=[pltpu.SemaphoreType.DMA((len(chunks),))],
        cost_estimate=cost,
    )(x)


# ----------------------------------------------------------------------------
# 3) Benchmarking variant: lane-dense VMEM-tiled copy (HBM->VMEM->HBM).
# ----------------------------------------------------------------------------
_LANE_WIDTHS = (8192, 4096, 2048, 1024, 512, 256, 128)
_TARGET_BLOCK_BYTES = 8 * 1024 * 1024   # ~8 MiB/block
_VMEM_LIMIT_BYTES = 48 << 20            # 2 arrays x 2 bufs x 8 MiB = 32 MiB < 48 MiB (< v7x 64 MiB)


def _identity_copy_kernel(x_ref, o_ref):
    o_ref[...] = x_ref[...]


def _pick_lane_width(n: int):
    """Largest lane-dense (multiple-of-128) width that evenly divides n."""
    for w in _LANE_WIDTHS:
        if n % w == 0:
            return w
    return None


def _pick_block_rows(rows: int, width: int, itemsize: int) -> int:
    """Row-block near ~8 MiB, aligned to the dtype's packed-sublane group."""
    subl = max(1, 32 // itemsize)  # 8 for f32, 16 for bf16/f16, 32 for int8/fp8
    if rows <= subl:
        return rows                # full-dim block is always legal
    target = max(subl, (_TARGET_BLOCK_BYTES // (width * itemsize)) // subl * subl)
    block = min(target, rows)
    if rows >= 2 * subl:
        # keep >= 2 grid steps so the "parallel" axis shards across v7x's 2 TCs
        block = min(block, max(subl, (rows // 2) // subl * subl))
    return max(subl, block // subl * subl)


def identity_pallas_tiled(x: jax.Array) -> jax.Array:
    """Identity via a lane-dense, VMEM-pipelined copy (kept for benchmarking)."""
    if x.ndim == 0 or x.size == 0:
        return x

    n = x.size
    itemsize = jnp.dtype(x.dtype).itemsize
    width = _pick_lane_width(n)
    if width is None:
        # Size not a multiple of 128: never fall back to a giant single VMEM
        # block (VMEM OOM risk, worst on v7x) — use the HBM->HBM DMA path.
        return identity_pallas(x)

    rows = n // width
    block_rows = _pick_block_rows(rows, width, itemsize)
    grid = (pl.cdiv(rows, block_rows),)  # ragged final block handled by Pallas

    cost = pl.CostEstimate(flops=0, transcendentals=0, bytes_accessed=2 * n * itemsize)
    x2d = x.reshape(rows, width)
    y2d = pl.pallas_call(
        _identity_copy_kernel,
        out_shape=jax.ShapeDtypeStruct((rows, width), x.dtype),
        grid_spec=pl.GridSpec(
            grid=grid,
            in_specs=[pl.BlockSpec((block_rows, width), lambda i: (i, 0))],
            out_specs=pl.BlockSpec((block_rows, width), lambda i: (i, 0)),
        ),
        compiler_params=pltpu.CompilerParams(
            # parallel -> megacore sharding on v7x; neutral on v5e/v6e.
            dimension_semantics=("parallel",),
            vmem_limit_bytes=_VMEM_LIMIT_BYTES,
        ),
        cost_estimate=cost,
    )(x2d)
    return y2d.reshape(x.shape)


if __name__ == "__main__":
    key = jax.random.PRNGKey(0)
    x = jax.random.normal(key, (2, 4, 16, 16), dtype=jnp.float32)

    # 1) Default forward: zero-copy (the dominant optimization).
    y0 = identity(x)

    # 2) Pallas HBM->HBM DMA copy (exercises the Pallas path without VMEM).
    y1 = identity_pallas(x)
    jax.block_until_ready(y1)

    # 3) Pallas lane-dense VMEM-tiled copy (benchmark variant).
    y2 = identity_pallas_tiled(x)
    jax.block_until_ready(y2)

    for y in (y0, y1, y2):
        assert y.shape == x.shape, (y.shape, x.shape)
        assert y.dtype == x.dtype, (y.dtype, x.dtype)
        assert bool(jnp.all(y == x)), "identity output mismatch"

    print("KERNEL_OK")
</pallas_src>

<mosaic_0001>
module attributes {stable_mosaic.version = 11 : i64} {
  func.func @kernel(%arg0: memref<2x4x16x16xf32, #tpu.memory_space<any>>, %arg1: memref<2x4x16x16xf32, #tpu.memory_space<any>>, %arg2: memref<1x!tpu.dma_semaphore, #tpu.memory_space<semaphore_mem>>) attributes {dimension_semantics = [], scalar_prefetch = 0 : i64, scratch_operands = 1 : i64, tpu.core_type = #tpu.core_type<tc>} {
    %c0_i32 = arith.constant 0 : i32
    %0 = tpu.memref_slice %arg2[%c0_i32] : memref<1x!tpu.dma_semaphore, #tpu.memory_space<semaphore_mem>> -> memref<1x!tpu.dma_semaphore, #tpu.memory_space<semaphore_mem>>
    %1 = tpu.memref_squeeze %0 : memref<1x!tpu.dma_semaphore, #tpu.memory_space<semaphore_mem>> -> memref<!tpu.dma_semaphore, #tpu.memory_space<semaphore_mem>>
    tpu.enqueue_dma source(%arg0 : memref<2x4x16x16xf32, #tpu.memory_space<any>>) target(%arg1 : memref<2x4x16x16xf32, #tpu.memory_space<any>>) target_semaphore(%1 : memref<!tpu.dma_semaphore, #tpu.memory_space<semaphore_mem>>)
    %c0_i32_0 = arith.constant 0 : i32
    %2 = tpu.memref_slice %arg2[%c0_i32_0] : memref<1x!tpu.dma_semaphore, #tpu.memory_space<semaphore_mem>> -> memref<1x!tpu.dma_semaphore, #tpu.memory_space<semaphore_mem>>
    %3 = tpu.memref_squeeze %2 : memref<1x!tpu.dma_semaphore, #tpu.memory_space<semaphore_mem>> -> memref<!tpu.dma_semaphore, #tpu.memory_space<semaphore_mem>>
    tpu.wait_dma2 semaphore(%3 : memref<!tpu.dma_semaphore, #tpu.memory_space<semaphore_mem>>) src(%arg0 : memref<2x4x16x16xf32, #tpu.memory_space<any>>) dst(%arg1 : memref<2x4x16x16xf32, #tpu.memory_space<any>>)
    return
  }
}

</mosaic_0001>

<llo_original>
// kernel: tpu_custom_call.1
$region0: #{tpu_custom_call.1}
  #allocation0 [shape = 'u32[]', space=smem, size = 0x4, offset = 0x4, fixed_abs, tag = 'smem constant byte address 0x4 - core index']
  #allocation1 [shape = 'u32[144,128]{1,0:T(1,128)}', space=vmem, size = 0x12000, scoped, tag = 'internal scratch']
  #allocation2 [shape = 's32[1]{0}', space=sflag, size = 0x4, scoped, tag = 'scratch operand']
  #allocation3 [shape = 's32[]', space=sflag, size = 0x4, offset = 0, fixed_abs, tag = 'sflag constant byte address 0x0 - dummy sync flag']
  #allocation4 [shape = 'u32[0]{0}', space=smem, size = 0, offset = 0, fixed_abs, tag = 'smem constant byte address 0x0 - null']
  %s0 = inlined_call_operand.hbm [shape: f32[2,4,16,16], index: 0, kind: input, shape index: {}]
  %s1 = inlined_call_operand.hbm [shape: f32[2,4,16,16], index: 1, kind: output, shape index: {}]
  %s2 = sld [smem:[#allocation0]]
  $region2: #{tpu_custom_call.1} parent=0
    _
  %s4 = ssub.s32 1, %s2
  %s5 = scalar_select 0, %s4, %s2
  %s7 = sshll.u32 1, 14
  %s8 = sxor.u32 4294967295, %s7
  %s11 = sshll.u32 3, 24
  %s12 = sxor.u32 4294967295, %s11
  %s13 = sand.u32 0, %s12
  %s15 = sor.u32 %s13, 0
  %18 = dma.general %s0, 2048, %s1, [#allocation2], [#allocation3], [#allocation4], %s15, 0
  %s19 = smul.u32 2, 4
  %s20 = smul.u32 %s19, 16
  %s21 = smul.u32 %s20, 1
  %s22 = sshll.u32 %s21, 4
  %23 = dma.done [#allocation2], %s22
  %24 = vsyncmov [#allocation2]
  %s25 = vpop.sfrf %24
  %p26 = scmp.eq.s32.totalorder %s25, 0
  %p27 = pneg %p26
  %29 = shalt.err (%p27)

</llo_original>
